<compile_context>
chip_gen: v7x
topology: tpu7x:2x2x1
jax: 0.10.0
libtpu: 0.0.40
codegen_flags: <defaults>
</compile_context>

<pallas_src>
import functools

import jax
import jax.numpy as jnp
from jax.experimental import pallas as pl
from jax.experimental.pallas import tpu as pltpu


def _dc_ce_stats_kernel(x_ref, t_ref, stats_ref, *, n_classes, tile_s,
                        grid_p, grid_j, hw, needs_mask):
    """Accumulates per-class [tp, p_sum, onehot_sum] and the CE partial sum.

    x_ref:     (1, C, tile_s, 128) logits block (input dtype, cast to f32 here)
    t_ref:     (1, 1, tile_s, 128) integer label block (any int dtype)
    stats_ref: (1, 1, 3*C+1, 128) f32, resident across the pixel-tile axis.
               rows [0,C)   : per-class tp          lane partials
               rows [C,2C)  : per-class sum(p)      lane partials
               rows [2C,3C) : per-class sum(onehot) lane partials
               row  3C      : cross-entropy         lane partials
    """
    p = pl.program_id(1)
    j = pl.program_id(2)

    @pl.when(j == 0)
    def _():
        stats_ref[...] = jnp.zeros_like(stats_ref)

    def accumulate(mask_tail):
        shape = (tile_s, 128)
        # Dense per-class slabs, cast to f32 in-register.
        xs = [x_ref[0, c].astype(jnp.float32) for c in range(n_classes)]
        t = t_ref[0, 0].astype(jnp.int32)          # in-register label cast

        if mask_tail:
            row = jax.lax.broadcasted_iota(jnp.int32, shape, 0)
            lane = jax.lax.broadcasted_iota(jnp.int32, shape, 1)
            base = (p * grid_j + j) * tile_s       # first slab row of this tile
            valid = ((base + row) * 128 + lane) < hw
            vf = valid.astype(jnp.float32)
            # Slab rows past the array end are undefined (possibly NaN) ->
            # select-clamp so garbage cannot propagate through exp/log.
            xs = [jnp.where(valid, xc, 0.0) for xc in xs]

        # softmax over classes == F.softmax(x, 1), unrolled element-wise.
        m = xs[0]
        for c in range(1, n_classes):
            m = jnp.maximum(m, xs[c])
        es = [jnp.exp(xc - m) for xc in xs]
        s = es[0]
        for c in range(1, n_classes):
            s = s + es[c]
        inv_s = 1.0 / s                 # exact reciprocal (EUP has slack now)
        lse = m + jnp.log(s)            # logsumexp for the exact CE path

        tp_rows, ps_rows, oh_rows = [], [], []
        x_t = jnp.zeros(shape, jnp.float32)
        for c in range(n_classes):
            # scatter_(1, gt, 1) equivalent: per-class scalar compare.
            # NOTE: out-of-range labels give an all-zero one-hot (CE then
            # contributes lse) instead of erroring like torch CrossEntropyLoss.
            onehot = (t == c).astype(jnp.float32)
            if mask_tail:
                onehot = onehot * vf
            prob = es[c] * inv_s
            x_t = x_t + xs[c] * onehot                       # logit[target]
            tp_rows.append(jnp.sum(prob * onehot, axis=0, keepdims=True))
            if mask_tail:
                prob = prob * vf
            ps_rows.append(jnp.sum(prob, axis=0, keepdims=True))
            oh_rows.append(jnp.sum(onehot, axis=0, keepdims=True))

        ce_vec = lse - x_t                                    # -log_softmax[t]
        if mask_tail:
            ce_vec = ce_vec * vf
        ce_row = jnp.sum(ce_vec, axis=0, keepdims=True)

        # Single coalesced, lane-dense RMW of the resident accumulator block.
        update = jnp.concatenate(tp_rows + ps_rows + oh_rows + [ce_row], axis=0)
        stats_ref[0, 0] += update

    if not needs_mask:
        accumulate(False)
    elif grid_p * grid_j == 1:
        accumulate(True)
    else:
        is_last = jnp.logical_and(p == grid_p - 1, j == grid_j - 1)

        @pl.when(jnp.logical_not(is_last))
        def _():
            accumulate(False)

        @pl.when(is_last)
        def _():
            accumulate(True)


def _choose_tile_s(num_slabs, n_classes, itemsize, target_block_bytes):
    """#128-lane slab rows per tile: ~target_block_bytes of logits, aligned."""
    align = 8 if itemsize >= 4 else (16 if itemsize == 2 else 32)
    cap = max(1, target_block_bytes // (n_classes * 128 * itemsize))
    if num_slabs <= cap:
        return num_slabs                 # one tile along the slab axis
    tile = max(align, (cap // align) * align)
    return num_slabs if tile >= num_slabs else tile


def dc_and_ce_loss(net_output, target, *, smooth=1.0,
                   target_block_bytes=2 * 1024 * 1024):
    """DC_and_CE_loss.forward(net_output, target) with uncertainty=None.

    net_output: (B, C, H, W) float logits (f32 or bf16; cast to f32 in-kernel)
    target:     (B, 1, H, W) or (B, H, W) integer labels (any int dtype;
                cast in-register inside the kernel -- no wrapper HBM pass).
    """
    b, c, h, w = net_output.shape
    if target.ndim == net_output.ndim - 1:
        target = target[:, None]
    hw = h * w
    hw_pad = ((hw + 127) // 128) * 128

    # Free contiguous views; the pad only materializes when H*W % 128 != 0.
    x = net_output.reshape(b, c, hw)
    t = target.reshape(b, 1, hw)
    if hw_pad != hw:
        x = jnp.pad(x, ((0, 0), (0, 0), (0, hw_pad - hw)))
        t = jnp.pad(t, ((0, 0), (0, 0), (0, hw_pad - hw)))
    num_slabs = hw_pad // 128
    x = x.reshape(b, c, num_slabs, 128)
    t = t.reshape(b, 1, num_slabs, 128)

    itemsize = jnp.dtype(net_output.dtype).itemsize
    tile_s = _choose_tile_s(num_slabs, c, itemsize, target_block_bytes)
    grid_j = pl.cdiv(num_slabs, tile_s)

    # Split the pixel range across an extra parallel grid axis when the batch
    # is too small to keep both TensorCores busy (v7x megacore).
    n_split = 2 if (b == 1 and grid_j >= 2 and grid_j % 2 == 0) else 1
    jp = grid_j // n_split

    needs_mask = (grid_j * tile_s * 128) != hw
    r = 3 * c + 1

    kernel = functools.partial(
        _dc_ce_stats_kernel, n_classes=c, tile_s=tile_s,
        grid_p=n_split, grid_j=jp, hw=hw, needs_mask=needs_mask)

    stats = pl.pallas_call(
        kernel,
        out_shape=jax.ShapeDtypeStruct((b, n_split, r, 128), jnp.float32),
        grid_spec=pltpu.PrefetchScalarGridSpec(
            num_scalar_prefetch=0,
            grid=(b, n_split, jp),
            in_specs=[
                pl.BlockSpec((1, c, tile_s, 128),
                             lambda bi, p, j: (bi, 0, p * jp + j, 0)),
                pl.BlockSpec((1, 1, tile_s, 128),
                             lambda bi, p, j: (bi, 0, p * jp + j, 0)),
            ],
            out_specs=pl.BlockSpec((1, 1, r, 128),
                                   lambda bi, p, j: (bi, p, 0, 0)),
        ),
        compiler_params=pltpu.CompilerParams(
            dimension_semantics=("parallel", "parallel", "arbitrary")),
    )(x, t)

    # Tiny epilogue reduction of the (B, n_split, 3C+1, 128) lane partials.
    tp = jnp.sum(stats[:, :, 0:c, :], axis=(0, 1, 3))          # (C,)
    p_sum = jnp.sum(stats[:, :, c:2 * c, :], axis=(0, 1, 3))
    oh_sum = jnp.sum(stats[:, :, 2 * c:3 * c, :], axis=(0, 1, 3))
    ce_sum = jnp.sum(stats[:, :, 3 * c, :])
    fp = p_sum - tp                                             # sum(p) - tp
    fn = oh_sum - tp                                            # sum(1hot) - tp

    # SoftDiceLoss tail (dc[1:] drops the background class, as in PyTorch).
    nominator = 2.0 * tp + smooth
    denominator = 2.0 * tp + fp + fn + smooth
    dc = nominator / (denominator + 1e-8)
    dc_loss = -jnp.mean(dc[1:])

    # RobustCrossEntropyLoss (mean reduction over all pixels).
    ce_loss = ce_sum / (b * hw)

    # aggregate = 'sum', weight_ce = weight_dice = 1
    return ce_loss + dc_loss


def _reference_jax(net_output, target, smooth=1.0):
    # pure-JAX reference of the PyTorch forward, for correctness check
    b, c, h, w = net_output.shape
    if target.ndim == net_output.ndim - 1:
        target = target[:, None]
    x = jax.nn.softmax(net_output.astype(jnp.float32), axis=1)
    onehot = jax.nn.one_hot(target[:, 0].astype(jnp.int32), c, axis=1,
                            dtype=jnp.float32)
    axes = (0, 2, 3)
    tp = jnp.sum(x * onehot, axis=axes)
    fp = jnp.sum(x * (1.0 - onehot), axis=axes)
    fn = jnp.sum((1.0 - x) * onehot, axis=axes)
    dc = (2.0 * tp + smooth) / (2.0 * tp + fp + fn + smooth + 1e-8)
    dc_loss = -jnp.mean(dc[1:])
    logp = jax.nn.log_softmax(net_output.astype(jnp.float32), axis=1)
    ce = -jnp.sum(logp * onehot, axis=1)
    ce_loss = jnp.mean(ce)
    return ce_loss + dc_loss


if __name__ == "__main__":
    key = jax.random.PRNGKey(0)
    ks = jax.random.split(key, 8)

    def check(name, net_output, target, **kw):
        loss = jax.block_until_ready(dc_and_ce_loss(net_output, target, **kw))
        ref = jax.block_until_ready(_reference_jax(net_output, target))
        assert jnp.allclose(loss, ref, atol=1e-3, rtol=1e-3), (name, loss, ref)

    # Case 1: B=2, C=4, 16x16 -- single dense tile per batch, no masking.
    x1 = jax.random.normal(ks[0], (2, 4, 16, 16), dtype=jnp.float32)
    t1 = jax.random.randint(ks[1], (2, 1, 16, 16), 0, 4, dtype=jnp.int32)
    check("case1", x1, t1)

    # Case 2: B=1, C=3, 9x20 -- H*W % 128 != 0 -> padded lanes + masked tile.
    x2 = jax.random.normal(ks[2], (1, 3, 9, 20), dtype=jnp.float32)
    t2 = jax.random.randint(ks[3], (1, 1, 9, 20), 0, 3, dtype=jnp.int32)
    check("case2", x2, t2)

    # Case 3: B=1, C=4, 32x64 with a tiny tile budget -> exercises the
    # small-batch pixel split (n_split=2), no masking.
    x3 = jax.random.normal(ks[4], (1, 4, 32, 64), dtype=jnp.float32)
    t3 = jax.random.randint(ks[5], (1, 1, 32, 64), 0, 4, dtype=jnp.int32)
    check("case3", x3, t3, target_block_bytes=16 * 1024)

    # Case 4: B=1, C=2, 36x40 with a tiny tile budget -> split + masked tail
    # (garbage sublane rows past the array AND zero-padded lanes).
    x4 = jax.random.normal(ks[6], (1, 2, 36, 40), dtype=jnp.float32)
    t4 = jax.random.randint(ks[7], (1, 1, 36, 40), 0, 2, dtype=jnp.int32)
    check("case4", x4, t4, target_block_bytes=8 * 1024)

    print("KERNEL_OK")
</pallas_src>

<mosaic_0001>
module attributes {stable_mosaic.version = 11 : i64} {
  func.func @_dc_ce_stats_kernel(%arg0: i32, %arg1: i32, %arg2: i32, %arg3: memref<1x4x2x128xf32, #tpu.memory_space<vmem>>, %arg4: memref<1x1x2x128xi32, #tpu.memory_space<vmem>>, %arg5: memref<1x1x13x128xf32, #tpu.memory_space<vmem>>) attributes {dimension_semantics = [#tpu.dimension_semantics<parallel>, #tpu.dimension_semantics<parallel>, #tpu.dimension_semantics<arbitrary>], iteration_bounds = array<i64: 2, 1, 1>, scalar_prefetch = 0 : i64, scratch_operands = 0 : i64, tpu.core_type = #tpu.core_type<tc>, window_params = [{transform_indices = @transform_0, window_bounds = array<i64: 1, 4, 2, 128>}, {transform_indices = @transform_1, window_bounds = array<i64: 1, 1, 2, 128>}, {transform_indices = @transform_2, window_bounds = array<i64: 1, 1, 13, 128>}]} {
    %c0_i32 = arith.constant 0 : i32
    %0 = arith.cmpi eq, %arg2, %c0_i32 : i32
    %1 = arith.extui %0 : i1 to i32
    %c0_i32_0 = arith.constant 0 : i32
    %2 = arith.cmpi ne, %1, %c0_i32_0 : i32
    scf.if %2 {
      %cst_40 = arith.constant 0.000000e+00 : f32
      %98 = vector.broadcast %cst_40 : f32 to vector<1x1x13x128xf32>
      %c0_41 = arith.constant 0 : index
      %c0_42 = arith.constant 0 : index
      %c0_43 = arith.constant 0 : index
      %c0_44 = arith.constant 0 : index
      %99 = vector.load %arg5[%c0_41, %c0_42, %c0_43, %c0_44] : memref<1x1x13x128xf32, #tpu.memory_space<vmem>>, vector<1x1x13x128xf32>
      tpu.vector_store %arg5[%c0_41, %c0_42, %c0_43, %c0_44], %98 {strides = array<i32>} : memref<1x1x13x128xf32, #tpu.memory_space<vmem>>, vector<1x1x13x128xf32>,
    } else {
    }
    %c0 = arith.constant 0 : index
    %c0_1 = arith.constant 0 : index
    %c0_2 = arith.constant 0 : index
    %c0_3 = arith.constant 0 : index
    %3 = vector.load %arg3[%c0, %c0_1, %c0_2, %c0_3] : memref<1x4x2x128xf32, #tpu.memory_space<vmem>>, vector<1x1x2x128xf32>
    %4 = vector.shape_cast %3 : vector<1x1x2x128xf32> to vector<2x128xf32>
    %c0_4 = arith.constant 0 : index
    %c1 = arith.constant 1 : index
    %c0_5 = arith.constant 0 : index
    %c0_6 = arith.constant 0 : index
    %5 = vector.load %arg3[%c0_4, %c1, %c0_5, %c0_6] : memref<1x4x2x128xf32, #tpu.memory_space<vmem>>, vector<1x1x2x128xf32>
    %6 = vector.shape_cast %5 : vector<1x1x2x128xf32> to vector<2x128xf32>
    %c0_7 = arith.constant 0 : index
    %c2 = arith.constant 2 : index
    %c0_8 = arith.constant 0 : index
    %c0_9 = arith.constant 0 : index
    %7 = vector.load %arg3[%c0_7, %c2, %c0_8, %c0_9] : memref<1x4x2x128xf32, #tpu.memory_space<vmem>>, vector<1x1x2x128xf32>
    %8 = vector.shape_cast %7 : vector<1x1x2x128xf32> to vector<2x128xf32>
    %c0_10 = arith.constant 0 : index
    %c3 = arith.constant 3 : index
    %c0_11 = arith.constant 0 : index
    %c0_12 = arith.constant 0 : index
    %9 = vector.load %arg3[%c0_10, %c3, %c0_11, %c0_12] : memref<1x4x2x128xf32, #tpu.memory_space<vmem>>, vector<1x1x2x128xf32>
    %10 = vector.shape_cast %9 : vector<1x1x2x128xf32> to vector<2x128xf32>
    %c0_13 = arith.constant 0 : index
    %c0_14 = arith.constant 0 : index
    %c0_15 = arith.constant 0 : index
    %c0_16 = arith.constant 0 : index
    %11 = vector.load %arg4[%c0_13, %c0_14, %c0_15, %c0_16] : memref<1x1x2x128xi32, #tpu.memory_space<vmem>>, vector<1x1x2x128xi32>
    %12 = vector.shape_cast %11 : vector<1x1x2x128xi32> to vector<2x128xi32>
    %13 = arith.maximumf %4, %6 : vector<2x128xf32>
    %14 = arith.maximumf %13, %8 : vector<2x128xf32>
    %15 = arith.maximumf %14, %10 : vector<2x128xf32>
    %16 = arith.subf %4, %15 : vector<2x128xf32>
    %17 = math.exp %16 : vector<2x128xf32>
    %18 = arith.subf %6, %15 : vector<2x128xf32>
    %19 = math.exp %18 : vector<2x128xf32>
    %20 = arith.subf %8, %15 : vector<2x128xf32>
    %21 = math.exp %20 : vector<2x128xf32>
    %22 = arith.subf %10, %15 : vector<2x128xf32>
    %23 = math.exp %22 : vector<2x128xf32>
    %24 = arith.addf %17, %19 : vector<2x128xf32>
    %25 = arith.addf %24, %21 : vector<2x128xf32>
    %26 = arith.addf %25, %23 : vector<2x128xf32>
    %cst = arith.constant 1.000000e+00 : f32
    %27 = vector.broadcast %cst : f32 to vector<2x128xf32>
    %28 = arith.divf %27, %26 : vector<2x128xf32>
    %29 = math.log %26 : vector<2x128xf32>
    %30 = arith.addf %15, %29 : vector<2x128xf32>
    %cst_17 = arith.constant 0.000000e+00 : f32
    %31 = vector.broadcast %cst_17 : f32 to vector<2x128xf32>
    %c0_i32_18 = arith.constant 0 : i32
    %32 = vector.broadcast %c0_i32_18 : i32 to vector<2x128xi32>
    %33 = arith.cmpi eq, %12, %32 : vector<2x128xi32>
    %34 = arith.extui %33 : vector<2x128xi1> to vector<2x128xi32>
    %35 = arith.sitofp %34 : vector<2x128xi32> to vector<2x128xf32>
    %36 = arith.mulf %17, %28 : vector<2x128xf32>
    %37 = arith.mulf %4, %35 : vector<2x128xf32>
    %38 = arith.addf %31, %37 : vector<2x128xf32>
    %39 = arith.mulf %36, %35 : vector<2x128xf32>
    %cst_19 = arith.constant dense<0.000000e+00> : vector<128xf32>
    %40 = vector.multi_reduction <add>, %39, %cst_19 [0] : vector<2x128xf32> to vector<128xf32>
    %41 = vector.shape_cast %40 : vector<128xf32> to vector<1x128xf32>
    %cst_20 = arith.constant dense<0.000000e+00> : vector<128xf32>
    %42 = vector.multi_reduction <add>, %36, %cst_20 [0] : vector<2x128xf32> to vector<128xf32>
    %43 = vector.shape_cast %42 : vector<128xf32> to vector<1x128xf32>
    %cst_21 = arith.constant dense<0.000000e+00> : vector<128xf32>
    %44 = vector.multi_reduction <add>, %35, %cst_21 [0] : vector<2x128xf32> to vector<128xf32>
    %45 = vector.shape_cast %44 : vector<128xf32> to vector<1x128xf32>
    %c1_i32 = arith.constant 1 : i32
    %46 = vector.broadcast %c1_i32 : i32 to vector<2x128xi32>
    %47 = arith.cmpi eq, %12, %46 : vector<2x128xi32>
    %48 = arith.extui %47 : vector<2x128xi1> to vector<2x128xi32>
    %49 = arith.sitofp %48 : vector<2x128xi32> to vector<2x128xf32>
    %50 = arith.mulf %19, %28 : vector<2x128xf32>
    %51 = arith.mulf %6, %49 : vector<2x128xf32>
    %52 = arith.addf %38, %51 : vector<2x128xf32>
    %53 = arith.mulf %50, %49 : vector<2x128xf32>
    %cst_22 = arith.constant dense<0.000000e+00> : vector<128xf32>
    %54 = vector.multi_reduction <add>, %53, %cst_22 [0] : vector<2x128xf32> to vector<128xf32>
    %55 = vector.shape_cast %54 : vector<128xf32> to vector<1x128xf32>
    %cst_23 = arith.constant dense<0.000000e+00> : vector<128xf32>
    %56 = vector.multi_reduction <add>, %50, %cst_23 [0] : vector<2x128xf32> to vector<128xf32>
    %57 = vector.shape_cast %56 : vector<128xf32> to vector<1x128xf32>
    %cst_24 = arith.constant dense<0.000000e+00> : vector<128xf32>
    %58 = vector.multi_reduction <add>, %49, %cst_24 [0] : vector<2x128xf32> to vector<128xf32>
    %59 = vector.shape_cast %58 : vector<128xf32> to vector<1x128xf32>
    %c2_i32 = arith.constant 2 : i32
    %60 = vector.broadcast %c2_i32 : i32 to vector<2x128xi32>
    %61 = arith.cmpi eq, %12, %60 : vector<2x128xi32>
    %62 = arith.extui %61 : vector<2x128xi1> to vector<2x128xi32>
    %63 = arith.sitofp %62 : vector<2x128xi32> to vector<2x128xf32>
    %64 = arith.mulf %21, %28 : vector<2x128xf32>
    %65 = arith.mulf %8, %63 : vector<2x128xf32>
    %66 = arith.addf %52, %65 : vector<2x128xf32>
    %67 = arith.mulf %64, %63 : vector<2x128xf32>
    %cst_25 = arith.constant dense<0.000000e+00> : vector<128xf32>
    %68 = vector.multi_reduction <add>, %67, %cst_25 [0] : vector<2x128xf32> to vector<128xf32>
    %69 = vector.shape_cast %68 : vector<128xf32> to vector<1x128xf32>
    %cst_26 = arith.constant dense<0.000000e+00> : vector<128xf32>
    %70 = vector.multi_reduction <add>, %64, %cst_26 [0] : vector<2x128xf32> to vector<128xf32>
    %71 = vector.shape_cast %70 : vector<128xf32> to vector<1x128xf32>
    %cst_27 = arith.constant dense<0.000000e+00> : vector<128xf32>
    %72 = vector.multi_reduction <add>, %63, %cst_27 [0] : vector<2x128xf32> to vector<128xf32>
    %73 = vector.shape_cast %72 : vector<128xf32> to vector<1x128xf32>
    %c3_i32 = arith.constant 3 : i32
    %74 = vector.broadcast %c3_i32 : i32 to vector<2x128xi32>
    %75 = arith.cmpi eq, %12, %74 : vector<2x128xi32>
    %76 = arith.extui %75 : vector<2x128xi1> to vector<2x128xi32>
    %77 = arith.sitofp %76 : vector<2x128xi32> to vector<2x128xf32>
    %78 = arith.mulf %23, %28 : vector<2x128xf32>
    %79 = arith.mulf %10, %77 : vector<2x128xf32>
    %80 = arith.addf %66, %79 : vector<2x128xf32>
    %81 = arith.mulf %78, %77 : vector<2x128xf32>
    %cst_28 = arith.constant dense<0.000000e+00> : vector<128xf32>
    %82 = vector.multi_reduction <add>, %81, %cst_28 [0] : vector<2x128xf32> to vector<128xf32>
    %83 = vector.shape_cast %82 : vector<128xf32> to vector<1x128xf32>
    %cst_29 = arith.constant dense<0.000000e+00> : vector<128xf32>
    %84 = vector.multi_reduction <add>, %78, %cst_29 [0] : vector<2x128xf32> to vector<128xf32>
    %85 = vector.shape_cast %84 : vector<128xf32> to vector<1x128xf32>
    %cst_30 = arith.constant dense<0.000000e+00> : vector<128xf32>
    %86 = vector.multi_reduction <add>, %77, %cst_30 [0] : vector<2x128xf32> to vector<128xf32>
    %87 = vector.shape_cast %86 : vector<128xf32> to vector<1x128xf32>
    %88 = arith.subf %30, %80 : vector<2x128xf32>
    %cst_31 = arith.constant dense<0.000000e+00> : vector<128xf32>
    %89 = vector.multi_reduction <add>, %88, %cst_31 [0] : vector<2x128xf32> to vector<128xf32>
    %90 = vector.shape_cast %89 : vector<128xf32> to vector<1x128xf32>
    %91 = tpu.concatenate %41, %55, %69, %83, %43, %57, %71, %85, %45, %59, %73, %87, %90 in 0 : vector<1x128xf32>, vector<1x128xf32>, vector<1x128xf32>, vector<1x128xf32>, vector<1x128xf32>, vector<1x128xf32>, vector<1x128xf32>, vector<1x128xf32>, vector<1x128xf32>, vector<1x128xf32>, vector<1x128xf32>, vector<1x128xf32>, vector<1x128xf32> -> vector<13x128xf32>
    %c0_32 = arith.constant 0 : index
    %c0_33 = arith.constant 0 : index
    %c0_34 = arith.constant 0 : index
    %c0_35 = arith.constant 0 : index
    %92 = vector.load %arg5[%c0_32, %c0_33, %c0_34, %c0_35] : memref<1x1x13x128xf32, #tpu.memory_space<vmem>>, vector<1x1x13x128xf32>
    %93 = vector.shape_cast %92 : vector<1x1x13x128xf32> to vector<13x128xf32>
    %94 = arith.addf %93, %91 : vector<13x128xf32>
    %c0_36 = arith.constant 0 : index
    %c0_37 = arith.constant 0 : index
    %c0_38 = arith.constant 0 : index
    %c0_39 = arith.constant 0 : index
    %95 = vector.load %arg5[%c0_36, %c0_37, %c0_38, %c0_39] : memref<1x1x13x128xf32, #tpu.memory_space<vmem>>, vector<1x1x13x128xf32>
    %96 = vector.shape_cast %95 : vector<1x1x13x128xf32> to vector<13x128xf32>
    %97 = vector.shape_cast %94 : vector<13x128xf32> to vector<1x1x13x128xf32>
    tpu.vector_store %arg5[%c0_36, %c0_37, %c0_38, %c0_39], %97 {strides = array<i32>} : memref<1x1x13x128xf32, #tpu.memory_space<vmem>>, vector<1x1x13x128xf32>,
    return
  }
  func.func @transform_0(%arg0: i32, %arg1: i32, %arg2: i32) -> (i32, i32, i32, i32) {
    %c1_i32 = arith.constant 1 : i32
    %0 = arith.muli %arg1, %c1_i32 : i32
    %1 = arith.addi %0, %arg2 : i32
    %c0_i32 = arith.constant 0 : i32
    %c0_i32_0 = arith.constant 0 : i32
    %c0_i32_1 = arith.constant 0 : i32
    return %arg0, %c0_i32, %1, %c0_i32_0 : i32, i32, i32, i32
  }
  func.func @transform_1(%arg0: i32, %arg1: i32, %arg2: i32) -> (i32, i32, i32, i32) {
    %c1_i32 = arith.constant 1 : i32
    %0 = arith.muli %arg1, %c1_i32 : i32
    %1 = arith.addi %0, %arg2 : i32
    %c0_i32 = arith.constant 0 : i32
    %c0_i32_0 = arith.constant 0 : i32
    %c0_i32_1 = arith.constant 0 : i32
    return %arg0, %c0_i32, %1, %c0_i32_0 : i32, i32, i32, i32
  }
  func.func @transform_2(%arg0: i32, %arg1: i32, %arg2: i32) -> (i32, i32, i32, i32) {
    %c0_i32 = arith.constant 0 : i32
    %c0_i32_0 = arith.constant 0 : i32
    %c0_i32_1 = arith.constant 0 : i32
    return %arg0, %arg1, %c0_i32, %c0_i32_0 : i32, i32, i32, i32
  }
}

</mosaic_0001>

<llo_original>
// kernel: tpu_custom_call.1
$region0: #{tpu_custom_call.1}
  #allocation0 [shape = 'u32[]', space=smem, size = 0x4, offset = 0x4, fixed_abs, tag = 'smem constant byte address 0x4 - core index']
  #allocation1 [shape = 'u32[144,128]{1,0:T(1,128)}', space=vmem, size = 0x12000, scoped, tag = 'internal scratch']
  %s0 = inlined_call_operand.hbm [shape: f32[2,4,2,128], index: 0, kind: input, shape index: {}]
  %s1 = inlined_call_operand.hbm [shape: s32[2,1,2,128], index: 1, kind: input, shape index: {}]
  %s2 = inlined_call_operand.vmem [shape: f32[2,1,13,128], index: 2, kind: output, shape index: {}]
  %s3 = sld [smem:[#allocation0]]
  $region53: #{tpu_custom_call.1} parent=0
    _
  %s5 = ssub.s32 1, %s3
  %s6 = scalar_select 0, %s5, %s3
  $region1: #{tpu_custom_call.1} parent=0
    #allocation2 [shape = 'u8[8192]{0}', space=vmem, size = 0x2000, scoped, tag = 'input window, operand 0']
    #allocation3 [shape = 's32[2]{0}', space=sflag, size = 0x8, scoped, tag = 'scoped memory for tpu_custom_call.1']
    #allocation4 [shape = 'u8[2048]{0}', space=vmem, size = 0x800, scoped, tag = 'input window, operand 1']
    #allocation5 [shape = 's32[2]{0}', space=sflag, size = 0x8, scoped, tag = 'scoped memory for tpu_custom_call.1']
    %7 = vsyncpa [#allocation3], 0
    %s8 = scalar_lea.sflag [#allocation3], 1
    %9 = vsyncpa %s8, 0
    %10 = vsyncpa [#allocation5], 0
    %s11 = scalar_lea.sflag [#allocation5], 1
    %12 = vsyncpa %s11, 0
    loop: start=0, step=1, limit=4
    $region2: #{tpu_custom_call.1} parent=1 // loop_pre_header
      _
    $region3: #{tpu_custom_call.1} parent=1 // loop_header
      %s14 = sphi 0, %s18
      %p15 = scmp.ge.s32.totalorder %s14, 4
      %s21 = sphi 0, %s40
      %s22 = sphi 0, %s36
      %s23 = sphi 0, %s32
      %s24 = sphi 0, %s21
      %s25 = sphi 0, %s22
      %s26 = sphi 0, %s23
      %s27 = sphi 0, %s24
      %s28 = sphi 0, %s25
      %s29 = sphi 0, %s26
      %s47 = sphi 0, %s49
      %s50 = sphi 0, %s47
      %s51 = sphi 0, %s50
      %s67 = sphi 0, %s51
      %s77 = sphi 0, %s79
      %s80 = sphi 0, %s77
      %s81 = sphi 0, %s80
      %s97 = sphi 0, %s81
      %s105 = sphi 0, %s107
      %s108 = sphi 0, %s105
      %s109 = sphi 0, %s108
      %s125 = sphi 0, %s109
    $region4: #{tpu_custom_call.1} parent=1 // loop_header_branch
      %17 = sbr.rel (%p15) target = $region8
    $region5: #{tpu_custom_call.1} parent=1 // loop_body
      %s19 = ssub.s32 %s14, 1
      %s20 = ssub.s32 %s14, 2
      %s30 = sadd.s32 1, %s23
      %p31 = scmp.ge.s32.totalorder %s30, 1
      %s32 = scalar_select %p31, 0, %s30
      %s33 = sadd.s32 1, %s22
      %s34 = scalar_select %p31, %s33, %s22
      %p35 = scmp.ge.s32.totalorder %s34, 1
      %s36 = scalar_select %p35, 0, %s34
      %s37 = sadd.s32 1, %s21
      %s38 = scalar_select %p35, %s37, %s21
      %p39 = scmp.ge.s32.totalorder %s38, 2
      %s40 = scalar_select %p39, 0, %s38
      %s41 = sadd.s32 %s22, %s23
      %s42 = sadd.s32 %s36, %s32
      %s43 = ssub.s32 %s21, %s40
      %s44 = ssub.s32 %s41, %s42
      %s45 = sor.u32 %s43, %s44
      %p46 = scmp.eq.s32.totalorder %s45, 0
      %s48 = sadd.s32 %s47, 1
      %s49 = scalar_select %p46, %s47, %s48
      %p52 = pneg %p46
      %p53 = scmp.eq.s32.totalorder %s14, 1
      %p54 = por %p52, %p53
      %p55 = scmp.ne.s32.totalorder %s47, %s50
      %p56 = scmp.eq.s32.totalorder %s14, 0
      %p57 = por %p55, %p56
      %p58 = scmp.ne.s32.totalorder %s47, %s50
      %p59 = scmp.eq.s32.totalorder %s19, 1
      %p60 = por %p58, %p59
      %p61 = scmp.ne.s32.totalorder %s50, %s51
      %p62 = scmp.eq.s32.totalorder %s19, 0
      %p63 = por %p61, %p62
      %p64 = scmp.ne.s32.totalorder %s50, %s51
      %p65 = scmp.eq.s32.totalorder %s20, 1
      %p66 = por %p64, %p65
      %p68 = scmp.ne.s32.totalorder %s51, %s67
      %p69 = scmp.eq.s32.totalorder %s20, 0
      %p70 = por %p68, %p69
      %s71 = sadd.s32 %s22, %s23
      %s72 = sadd.s32 %s36, %s32
      %s73 = ssub.s32 %s21, %s40
      %s74 = ssub.s32 %s71, %s72
      %s75 = sor.u32 %s73, %s74
      %p76 = scmp.eq.s32.totalorder %s75, 0
      %s78 = sadd.s32 %s77, 1
      %s79 = scalar_select %p76, %s77, %s78
      %p82 = pneg %p76
      %p83 = scmp.eq.s32.totalorder %s14, 1
      %p84 = por %p82, %p83
      %p85 = scmp.ne.s32.totalorder %s77, %s80
      %p86 = scmp.eq.s32.totalorder %s14, 0
      %p87 = por %p85, %p86
      %p88 = scmp.ne.s32.totalorder %s77, %s80
      %p89 = scmp.eq.s32.totalorder %s19, 1
      %p90 = por %p88, %p89
      %p91 = scmp.ne.s32.totalorder %s80, %s81
      %p92 = scmp.eq.s32.totalorder %s19, 0
      %p93 = por %p91, %p92
      %p94 = scmp.ne.s32.totalorder %s80, %s81
      %p95 = scmp.eq.s32.totalorder %s20, 1
      %p96 = por %p94, %p95
      %p98 = scmp.ne.s32.totalorder %s81, %s97
      %p99 = scmp.eq.s32.totalorder %s20, 0
      %p100 = por %p98, %p99
      %s101 = ssub.s32 %s21, %s40
      %s102 = ssub.s32 %s22, %s36
      %s103 = sor.u32 %s101, %s102
      %p104 = scmp.eq.s32.totalorder %s103, 0
      %s106 = sadd.s32 %s105, 1
      %s107 = scalar_select %p104, %s105, %s106
      %p110 = pneg %p104
      %p111 = scmp.eq.s32.totalorder %s14, 1
      %p112 = por %p110, %p111
      %p113 = scmp.ne.s32.totalorder %s105, %s108
      %p114 = scmp.eq.s32.totalorder %s14, 0
      %p115 = por %p113, %p114
      %p116 = scmp.ne.s32.totalorder %s105, %s108
      %p117 = scmp.eq.s32.totalorder %s19, 1
      %p118 = por %p116, %p117
      %p119 = scmp.ne.s32.totalorder %s108, %s109
      %p120 = scmp.eq.s32.totalorder %s19, 0
      %p121 = por %p119, %p120
      %p122 = scmp.ne.s32.totalorder %s108, %s109
      %p123 = scmp.eq.s32.totalorder %s20, 1
      %p124 = por %p122, %p123
      %p126 = scmp.ne.s32.totalorder %s109, %s125
      %p127 = scmp.eq.s32.totalorder %s20, 0
      %p128 = por %p126, %p127
      %p129 = scmp.le.s32.totalorder 1, %s14
      %p130 = scmp.lt.s32.totalorder %s14, 3
      %p131 = pnand %p129, %p130
      %p132 = pneg %p131
      // Predicated region
      $region9: #{tpu_custom_call.1} parent=5 // pred_check
        _
      $region10: #{tpu_custom_call.1} parent=5 // pred_check_branch
        %134 = sbr.rel (%p131) target = $region12
      $region11: #{tpu_custom_call.1} parent=5 // pred_region
        %s135 = ssub.s32 %s14, 1
      $region12: #{tpu_custom_call.1} parent=5 // pred_fallthru
        _
      %p136 = scmp.lt.s32.totalorder %s14, 2
      // Predicated region
      $region13: #{tpu_custom_call.1} parent=5 // pred_check
        %p137 = pneg %p136
      $region14: #{tpu_custom_call.1} parent=5 // pred_check_branch
        %139 = sbr.rel (%p137) target = $region16
      $region15: #{tpu_custom_call.1} parent=5 // pred_region
        // Predicated region
        $region17: #{tpu_custom_call.1} parent=15 // pred_check
          %p140 = pneg %p57
        $region18: #{tpu_custom_call.1} parent=15 // pred_check_branch
          %142 = sbr.rel (%p140) target = $region20
        $region19: #{tpu_custom_call.1} parent=15 // pred_region
          %s143 = sand.u32 %s47, 1
          %s144 = scalar_lea.sflag [#allocation3], %s143
          %s145 = sand.u32 %s47, 1
          %s146 = smul.addr %s145, 8
          %s147 = scalar_lea.vmem [#allocation2], %s146
          %s148 = sadd.s32 %s22, %s23
          %s150 = ssub.s32 128, 128
          %151 = vsyncadd %s144, %s150
          %s152 = smul.addr %s21, 4
          %s153 = sadd.s32 %s148, %s152
          %s154 = smul.addr %s153, 32
          %s155 = scalar_lea.hbm %s0, %s154
          %s156 = sshll.u32 %s147, 4
          %s157 = int_to_ptr.vmem [resolvable:$true] %s156
          %162 = dma.hbm_to_vmem [thread:$0]  %s155, 128, %s157, %s144, 32, 32, 2
        $region20: #{tpu_custom_call.1} parent=15 // pred_fallthru
          _
        // Predicated region
        $region21: #{tpu_custom_call.1} parent=15 // pred_check
          %p163 = pneg %p87
        $region22: #{tpu_custom_call.1} parent=15 // pred_check_branch
          %165 = sbr.rel (%p163) target = $region24
        $region23: #{tpu_custom_call.1} parent=15 // pred_region
          %s166 = sand.u32 %s77, 1
          %s167 = scalar_lea.sflag [#allocation5], %s166
          %s168 = sand.u32 %s77, 1
          %s169 = smul.addr %s168, 2
          %s170 = scalar_lea.vmem [#allocation4], %s169
          %s171 = sadd.s32 %s22, %s23
          %s173 = ssub.s32 32, 32
          %174 = vsyncadd %s167, %s173
          %s175 = sadd.s32 %s171, %s21
          %s176 = smul.addr %s175, 32
          %s177 = scalar_lea.hbm %s1, %s176
          %s179 = sshll.u32 %s170, 4
          %s180 = int_to_ptr.vmem [resolvable:$true] %s179
          %182 = dma.hbm_to_vmem [thread:$0]  %s177, 32, %s180, %s167
        $region24: #{tpu_custom_call.1} parent=15 // pred_fallthru
          _
      $region16: #{tpu_custom_call.1} parent=5 // pred_fallthru
        _
      %p183 = scmp.le.s32.totalorder 1, %s14
      %p184 = scmp.lt.s32.totalorder %s14, 3
      %p185 = pnand %p183, %p184
      %p186 = pneg %p185
      // Predicated region
      $region25: #{tpu_custom_call.1} parent=5 // pred_check
        _
      $region26: #{tpu_custom_call.1} parent=5 // pred_check_branch
        %188 = sbr.rel (%p185) target = $region28
      $region27: #{tpu_custom_call.1} parent=5 // pred_region
        %s189 = ssub.s32 %s14, 1
        %s190 = sand.u32 %s50, 1
        %s191 = scalar_lea.sflag [#allocation3], %s190
        %s192 = sand.u32 %s50, 1
        %s193 = smul.addr %s192, 8
        %s194 = scalar_lea.vmem [#allocation2], %s193
        // Predicated region
        $region29: #{tpu_custom_call.1} parent=27 // pred_check
          %p195 = pneg %p63
        $region30: #{tpu_custom_call.1} parent=27 // pred_check_branch
          %197 = sbr.rel (%p195) target = $region32
        $region31: #{tpu_custom_call.1} parent=27 // pred_region
          %198 = dma.done %s191, 128
        $region32: #{tpu_custom_call.1} parent=27 // pred_fallthru
          _
        %s199 = sand.u32 %s80, 1
        %s200 = scalar_lea.sflag [#allocation5], %s199
        %s201 = sand.u32 %s80, 1
        %s202 = smul.addr %s201, 2
        %s203 = scalar_lea.vmem [#allocation4], %s202
        // Predicated region
        $region33: #{tpu_custom_call.1} parent=27 // pred_check
          %p204 = pneg %p93
        $region34: #{tpu_custom_call.1} parent=27 // pred_check_branch
          %206 = sbr.rel (%p204) target = $region36
        $region35: #{tpu_custom_call.1} parent=27 // pred_region
          %207 = dma.done %s200, 32
        $region36: #{tpu_custom_call.1} parent=27 // pred_fallthru
          _
        %s208 = sand.u32 %s50, 1
        %s209 = scalar_lea.sflag [#allocation3], %s208
        %s210 = sand.u32 %s50, 1
        %s211 = smul.addr %s210, 8
        %s212 = scalar_lea.vmem [#allocation2], %s211
        %p213 = pneg %p63
        %p214 = pneg %p60
        %s215 = sand.u32 %s80, 1
        %s216 = scalar_lea.sflag [#allocation5], %s215
        %s217 = sand.u32 %s80, 1
        %s218 = smul.addr %s217, 2
        %s219 = scalar_lea.vmem [#allocation4], %s218
        %p220 = pneg %p93
        %p221 = pneg %p90
        %p222 = pneg %p121
        %p223 = pneg %p118
        %p224 = scmp.lt.s32.totalorder %s24, 1
        %s225 = scalar_select %p224, %s24, 1
        %p226 = scmp.lt.s32.totalorder %s25, 0
        %s227 = scalar_select %p226, %s25, 0
        %s228 = smul.addr %s227, 2
        %s229 = smul.addr %s225, 2
        %s230 = sadd.s32 %s228, %s229
        %s231 = smul.addr %s230, 8
        %s232 = scalar_lea.vmem %s2, %s231
        %s233 = sadd.s32 %s25, %s26
        %s234 = sadd.s32 %s25, %s26
        %p235 = scmp.lt.s32.totalorder %s24, 1
        %s236 = scalar_select %p235, %s24, 1
        %p237 = scmp.lt.s32.totalorder %s25, 0
        %s238 = scalar_select %p237, %s25, 0
        %s239 = smul.addr %s238, 2
        %s240 = smul.addr %s236, 2
        %s241 = sadd.s32 %s239, %s240
        %s242 = smul.addr %s241, 8
        %s243 = scalar_lea.vmem %s2, %s242
        %p244 = scmp.eq.s32.totalorder %s26, 0
        // Predicated region
        $region37: #{tpu_custom_call.1} parent=27 // pred_check
          %p245 = pneg %p244
        $region38: #{tpu_custom_call.1} parent=27 // pred_check_branch
          %247 = sbr.rel (%p245) target = $region40
        $region39: #{tpu_custom_call.1} parent=27 // pred_region
          %248 = vst [vmem:[%s243] sm:$0xff] 0.0
          %249 = vst [vmem:[%s243 + $0x8] sm:$0x1f] 0.0
        $region40: #{tpu_custom_call.1} parent=27 // pred_fallthru
          _
        %v250 = vld [vmem:[%s194] sm:$0x3]
        %s251 = scalar_lea.vmem %s194, 2 [#allocation2]
        %v252 = vld [vmem:[%s251] sm:$0x3]
        %s253 = scalar_lea.vmem %s194, 4 [#allocation2]
        %v254 = vld [vmem:[%s253] sm:$0x3]
        %s255 = scalar_lea.vmem %s194, 6 [#allocation2]
        %v256 = vld [vmem:[%s255] sm:$0x3]
        %v257 = vld [vmem:[%s203] sm:$0x3]
        %v258 = vmax.f32 %v250, %v252
        %v259 = vmax.f32 %v258, %v254
        %v260 = vmax.f32 %v259, %v256
        %v261 = vsub.f32 %v250, %v260
        %v262 = vmul.f32 %v261, 1.442695
        %v263 = vpow.pop %v262
        %v264 = vsub.f32 %v252, %v260
        %v265 = vmul.f32 %v264, 1.442695
        %v266 = vpow.pop %v265
        %v267 = vsub.f32 %v254, %v260
        %v268 = vmul.f32 %v267, 1.442695
        %v269 = vpow.pop %v268
        %v270 = vsub.f32 %v256, %v260
        %v271 = vmul.f32 %v270, 1.442695
        %v272 = vpow.pop %v271
        %v273 = vadd.f32 %v263, %v266
        %v274 = vadd.f32 %v273, %v269
        %v275 = vadd.f32 %v274, %v272
        %v276 = vrcp.pop %v275
        %v277 = vmul.f32 1.0, %v276
        %v278 = vlog2.pop %v275
        %v279 = vmul.f32 %v278, 0.6931472
        %v280 = vadd.f32 %v260, %v279
        %vm281 = vcmp.eq.s32.totalorder %v257, 0
        %v282 = vsel %vm281, 1, 0
        %v283 = vcvt.s32.f32 %v282
        %v284 = vmul.f32 %v263, %v277
        %v285 = vmul.f32 %v250, %v283
        %v286 = vadd.f32 %v285, 0.0
        %v287 = vmul.f32 %v284, %v283
        %vm288 = vcmask 1041408
        %v289 = vsel %vm288, %v287, 0.0
        %v290 = vrot.slane %v289, 4
        %v291 = vadd.f32 %v289, %v290
        %v292 = vrot.slane %v291, 2
        %v293 = vadd.f32 %v291, %v292
        %v294 = vrot.slane %v293, 1
        %v295 = vadd.f32 %v293, %v294
        %v296 = vsel %vm288, %v284, 0.0
        %v297 = vrot.slane %v296, 4
        %v298 = vadd.f32 %v296, %v297
        %v299 = vrot.slane %v298, 2
        %v300 = vadd.f32 %v298, %v299
        %v301 = vrot.slane %v300, 1
        %v302 = vadd.f32 %v300, %v301
        %v303 = vsel %vm288, %v283, 0.0
        %v304 = vrot.slane %v303, 4
        %v305 = vadd.f32 %v303, %v304
        %v306 = vrot.slane %v305, 2
        %v307 = vadd.f32 %v305, %v306
        %v308 = vrot.slane %v307, 1
        %v309 = vadd.f32 %v307, %v308
        %vm310 = vcmp.eq.s32.totalorder %v257, 1
        %v311 = vsel %vm310, 1, 0
        %v312 = vcvt.s32.f32 %v311
        %v313 = vmul.f32 %v266, %v277
        %v314 = vmul.f32 %v252, %v312
        %v315 = vadd.f32 %v286, %v314
        %v316 = vmul.f32 %v313, %v312
        %v317 = vsel %vm288, %v316, 0.0
        %v318 = vrot.slane %v317, 4
        %v319 = vadd.f32 %v317, %v318
        %v320 = vrot.slane %v319, 2
        %v321 = vadd.f32 %v319, %v320
        %v322 = vrot.slane %v321, 1
        %v323 = vadd.f32 %v321, %v322
        %v324 = vsel %vm288, %v313, 0.0
        %v325 = vrot.slane %v324, 4
        %v326 = vadd.f32 %v324, %v325
        %v327 = vrot.slane %v326, 2
        %v328 = vadd.f32 %v326, %v327
        %v329 = vrot.slane %v328, 1
        %v330 = vadd.f32 %v328, %v329
        %v331 = vsel %vm288, %v312, 0.0
        %v332 = vrot.slane %v331, 4
        %v333 = vadd.f32 %v331, %v332
        %v334 = vrot.slane %v333, 2
        %v335 = vadd.f32 %v333, %v334
        %v336 = vrot.slane %v335, 1
        %v337 = vadd.f32 %v335, %v336
        %vm338 = vcmp.eq.s32.totalorder %v257, 2
        %v339 = vsel %vm338, 1, 0
        %v340 = vcvt.s32.f32 %v339
        %v341 = vmul.f32 %v269, %v277
        %v342 = vmul.f32 %v254, %v340
        %v343 = vadd.f32 %v315, %v342
        %v344 = vmul.f32 %v341, %v340
        %v345 = vsel %vm288, %v344, 0.0
        %v346 = vrot.slane %v345, 4
        %v347 = vadd.f32 %v345, %v346
        %v348 = vrot.slane %v347, 2
        %v349 = vadd.f32 %v347, %v348
        %v350 = vrot.slane %v349, 1
        %v351 = vadd.f32 %v349, %v350
        %v352 = vsel %vm288, %v341, 0.0
        %v353 = vrot.slane %v352, 4
        %v354 = vadd.f32 %v352, %v353
        %v355 = vrot.slane %v354, 2
        %v356 = vadd.f32 %v354, %v355
        %v357 = vrot.slane %v356, 1
        %v358 = vadd.f32 %v356, %v357
        %v359 = vsel %vm288, %v340, 0.0
        %v360 = vrot.slane %v359, 4
        %v361 = vadd.f32 %v359, %v360
        %v362 = vrot.slane %v361, 2
        %v363 = vadd.f32 %v361, %v362
        %v364 = vrot.slane %v363, 1
        %v365 = vadd.f32 %v363, %v364
        %vm366 = vcmp.eq.s32.totalorder %v257, 3
        %v367 = vsel %vm366, 1, 0
        %v368 = vcvt.s32.f32 %v367
        %v369 = vmul.f32 %v272, %v277
        %v370 = vmul.f32 %v256, %v368
        %v371 = vadd.f32 %v343, %v370
        %v372 = vmul.f32 %v369, %v368
        %v373 = vsel %vm288, %v372, 0.0
        %v374 = vrot.slane %v373, 4
        %v375 = vadd.f32 %v373, %v374
        %v376 = vrot.slane %v375, 2
        %v377 = vadd.f32 %v375, %v376
        %v378 = vrot.slane %v377, 1
        %v379 = vadd.f32 %v377, %v378
        %v380 = vsel %vm288, %v369, 0.0
        %v381 = vrot.slane %v380, 4
        %v382 = vadd.f32 %v380, %v381
        %v383 = vrot.slane %v382, 2
        %v384 = vadd.f32 %v382, %v383
        %v385 = vrot.slane %v384, 1
        %v386 = vadd.f32 %v384, %v385
        %v387 = vsel %vm288, %v368, 0.0
        %v388 = vrot.slane %v387, 4
        %v389 = vadd.f32 %v387, %v388
        %v390 = vrot.slane %v389, 2
        %v391 = vadd.f32 %v389, %v390
        %v392 = vrot.slane %v391, 1
        %v393 = vadd.f32 %v391, %v392
        %v394 = vsub.f32 %v280, %v371
        %v395 = vsel %vm288, %v394, 0.0
        %v396 = vrot.slane %v395, 4
        %v397 = vadd.f32 %v395, %v396
        %v398 = vrot.slane %v397, 2
        %v399 = vadd.f32 %v397, %v398
        %v400 = vrot.slane %v399, 1
        %v401 = vadd.f32 %v399, %v400
        %vm402 = vcmask 1040384
        %v403 = vsel %vm402, %v295, %v323
        %v404 = vsel %vm288, %v403, %v351
        %vm405 = vcmask 1042432
        %v406 = vsel %vm405, %v404, %v379
        %vm407 = vcmask 1043456
        %v408 = vsel %vm407, %v406, %v302
        %vm409 = vcmask 1044480
        %v410 = vsel %vm409, %v408, %v330
        %vm411 = vcmask 1045504
        %v412 = vsel %vm411, %v410, %v358
        %vm413 = vcmask 1046528
        %v414 = vsel %vm413, %v412, %v386
        %v415 = vsel %vm402, %v309, %v337
        %v416 = vsel %vm288, %v415, %v365
        %v417 = vsel %vm405, %v416, %v393
        %v418 = vsel %vm407, %v417, %v401
        %v419 = vld [vmem:[%s243] sm:$0xff]
        %v420 = vld [vmem:[%s243 + $0x8] sm:$0x1f]
        %v421 = vadd.f32 %v419, %v414
        %v422 = vadd.f32 %v420, %v418
        %423 = vst [vmem:[%s243] sm:$0xff] %v421
        %424 = vst [vmem:[%s243 + $0x8] sm:$0x1f] %v422
        %p425 = scmp.lt.s32.totalorder %s24, 1
        %s426 = scalar_select %p425, %s24, 1
        %p427 = scmp.lt.s32.totalorder %s25, 0
        %s428 = scalar_select %p427, %s25, 0
        %s429 = smul.addr %s428, 2
        %s430 = smul.addr %s426, 2
        %s431 = sadd.s32 %s429, %s430
        %s432 = smul.addr %s431, 8
        %s433 = scalar_lea.vmem %s2, %s432
        // Predicated region
        $region41: #{tpu_custom_call.1} parent=27 // pred_check
          %p434 = pneg %p118
        $region42: #{tpu_custom_call.1} parent=27 // pred_check_branch
          %436 = sbr.rel (%p434) target = $region44
        $region43: #{tpu_custom_call.1} parent=27 // pred_region
          _
        $region44: #{tpu_custom_call.1} parent=27 // pred_fallthru
          _
      $region28: #{tpu_custom_call.1} parent=5 // pred_fallthru
        _
      %p437 = scmp.le.s32.totalorder 2, %s14
      // Predicated region
      $region45: #{tpu_custom_call.1} parent=5 // pred_check
        %p438 = pneg %p437
      $region46: #{tpu_custom_call.1} parent=5 // pred_check_branch
        %440 = sbr.rel (%p438) target = $region48
      $region47: #{tpu_custom_call.1} parent=5 // pred_region
        %s441 = ssub.s32 %s14, 2
        // Predicated region
        $region49: #{tpu_custom_call.1} parent=47 // pred_check
          %p442 = pneg %p124
        $region50: #{tpu_custom_call.1} parent=47 // pred_check_branch
          %444 = sbr.rel (%p442) target = $region52
        $region51: #{tpu_custom_call.1} parent=47 // pred_region
          %p445 = scmp.lt.s32.totalorder %s27, 1
          %s446 = scalar_select %p445, %s27, 1
          %p447 = scmp.lt.s32.totalorder %s28, 0
          %s448 = scalar_select %p447, %s28, 0
          %s449 = smul.addr %s448, 2
          %s450 = smul.addr %s446, 2
          %s451 = sadd.s32 %s449, %s450
          %s452 = smul.addr %s451, 8
          %s453 = scalar_lea.vmem %s2, %s452
        $region52: #{tpu_custom_call.1} parent=47 // pred_fallthru
          _
      $region48: #{tpu_custom_call.1} parent=5 // pred_fallthru
        _
    $region6: #{tpu_custom_call.1} parent=1 // loop_footer
      %s18 = sadd.s32 1, %s14
    $region7: #{tpu_custom_call.1} parent=1 // loop_footer_branch
      %13 = sbr.rel target = $region3
    $region8: #{tpu_custom_call.1} parent=1 // loop_exit
      _
    %454 = vsyncpa [#allocation3], 1
    %s455 = scalar_lea.sflag [#allocation3], 1
    %456 = vsyncpa %s455, 1
    %457 = vsyncpa [#allocation5], 1
    %s458 = scalar_lea.sflag [#allocation5], 1
    %459 = vsyncpa %s458, 1

</llo_original>
